<compile_context>
chip_gen: v7x
topology: tpu7x:2x2x1
jax: 0.10.0
libtpu: 0.0.40
codegen_flags: <defaults>
</compile_context>

<pallas_src>
import functools

import jax
import jax.numpy as jnp
from jax.experimental import pallas as pl
from jax.experimental.pallas import tpu as pltpu

_LANE = 128   # vreg lane width (last dim)
_SUBLANE = 8  # vreg sublane width (second-to-last dim)


def _round_up(x, m):
    return ((x + m - 1) // m) * m


# --------------------------------------------------------------------------
# Kernel
# --------------------------------------------------------------------------
def _mlp_fused_kernel(x_ref, *refs, num_layers):
    """Fused MLP on one row-tile.

    x_ref: [tm, K_pad]
    refs:  (w0, b0, w1, b1, ..., w_{L-1}, b_{L-1}, o_ref)
           w_i: [Kin_pad, Kout_i] (VMEM-resident), b_i: [1, Kout_i]
           (hidden Kout_i are 128-padded; the last layer's Kout is the true
            output_dim so the store is exactly N_out wide)
    o_ref: [tm, N_out]
    """
    o_ref = refs[-1]
    y = x_ref[...]
    for i in range(num_layers):
        w = refs[2 * i][...]
        b = refs[2 * i + 1][...]
        y = jnp.dot(y, w, preferred_element_type=jnp.float32) + b
        if i < num_layers - 1:
            y = jnp.maximum(y, 0.0)
    o_ref[...] = y.astype(o_ref.dtype)


# --------------------------------------------------------------------------
# Parameter init / one-time preparation (padding hoisted out of forward)
# --------------------------------------------------------------------------
def init_mlp_params(key, input_dim, hidden_dim, output_dim, num_layers):
    """Deterministic init matching nn.Linear shapes (W stored as (in, out))."""
    h = [hidden_dim] * (num_layers - 1)
    dims = list(zip([input_dim] + h, h + [output_dim]))
    params = []
    for (n_in, n_out) in dims:
        key, kw, kb = jax.random.split(key, 3)
        bound = 1.0 / jnp.sqrt(n_in)
        w = jax.random.uniform(kw, (n_in, n_out), jnp.float32, -bound, bound)
        b = jax.random.uniform(kb, (1, n_out), jnp.float32, -bound, bound)
        params.append((w, b))
    return params


def prepare_mlp_params(params):
    """Pad weights/biases to lane multiples ONCE (call at init, not per step).

    Hidden/input feature dims are padded to 128; the LAST layer's output dim is
    kept at the true output_dim so the kernel's store (and the HBM writeback)
    is exactly N_out lanes wide.
    """
    n_layers = len(params)
    prepared = []
    for i, (w, b) in enumerate(params):
        n_in, n_out = w.shape
        n_in_p = _round_up(n_in, _LANE)
        n_out_p = n_out if i == n_layers - 1 else _round_up(n_out, _LANE)
        wp = jnp.zeros((n_in_p, n_out_p), w.dtype).at[:n_in, :n_out].set(w)
        bp = jnp.zeros((1, n_out_p), b.dtype).at[:, :n_out].set(
            jnp.reshape(b, (1, n_out)))
        prepared.append((wp, bp))
    return prepared


# --------------------------------------------------------------------------
# Row-tile selection (adaptive, avoids >12.5% row-padding waste; gives the
# v7x megacore >=2 grid steps whenever M allows it)
# --------------------------------------------------------------------------
def _choose_tm(M, tm_max):
    M8 = _round_up(M, _SUBLANE)
    tm_max = max(_SUBLANE, (tm_max // _SUBLANE) * _SUBLANE)
    if M8 <= tm_max:
        # Whole problem fits in one tile: split into 2 tiles when possible so
        # the "parallel" grid axis can use both v7x TensorCores.
        if M8 >= 2 * _SUBLANE:
            return _round_up((M8 + 1) // 2, _SUBLANE)
        return M8
    tm = tm_max
    while True:
        waste = _round_up(M, tm) - M
        if waste * 8 <= M or tm <= _SUBLANE:
            return tm
        tm = max(_SUBLANE, ((tm // 2) // _SUBLANE) * _SUBLANE)


# --------------------------------------------------------------------------
# Forward (jit this — see __main__)
# --------------------------------------------------------------------------
def mlp_forward(padded_params, x, *, tm_max=512):
    """Matches MLP.forward: ReLU after every layer except the last.

    padded_params: output of prepare_mlp_params (padded once, reused).
    x: [..., input_dim] float32.  Returns [..., output_dim].
    """
    num_layers = len(padded_params)
    *lead, K = x.shape
    M = 1
    for d in lead:
        M *= d
    x2d = x.reshape(M, K)

    K_pad = padded_params[0][0].shape[0]       # padded input dim
    n_out = padded_params[-1][0].shape[1]      # true output dim (unpadded)

    # --- row tiling --------------------------------------------------------
    tm = _choose_tm(M, tm_max)
    M_pad = _round_up(M, tm)
    if M_pad != M or K_pad != K:
        x_p = jnp.zeros((M_pad, K_pad), x2d.dtype).at[:M, :K].set(x2d)
    else:
        x_p = x2d

    # --- BlockSpecs: x/out tiled over rows, weights/biases resident ---------
    in_specs = [pl.BlockSpec((tm, K_pad), lambda i: (i, 0))]
    flat_inputs = [x_p]
    for (wp, bp) in padded_params:
        in_specs.append(pl.BlockSpec(wp.shape, lambda i: (0, 0)))
        in_specs.append(pl.BlockSpec(bp.shape, lambda i: (0, 0)))
        flat_inputs.append(wp)
        flat_inputs.append(bp)
    out_spec = pl.BlockSpec((tm, n_out), lambda i: (i, 0))

    # --- explicit scoped-VMEM budget (resident weights are double-buffered
    #     by the pipeline even with a constant index_map) --------------------
    itemsize = 4  # f32
    vmem_est = 2 * tm * (K_pad + _round_up(n_out, _LANE)) * itemsize  # x + out
    for (wp, bp) in padded_params:
        vmem_est += 2 * (wp.shape[0] * _round_up(wp.shape[1], _LANE)
                         + _SUBLANE * _round_up(bp.shape[1], _LANE)) * itemsize
    vmem_limit = min(max(vmem_est * 3 // 2 + (1 << 20), 32 << 20), 100 << 20)

    out = pl.pallas_call(
        functools.partial(_mlp_fused_kernel, num_layers=num_layers),
        out_shape=jax.ShapeDtypeStruct((M_pad, n_out), x.dtype),
        grid_spec=pltpu.PrefetchScalarGridSpec(
            num_scalar_prefetch=0,
            grid=(M_pad // tm,),
            in_specs=in_specs,
            out_specs=out_spec,
        ),
        compiler_params=pltpu.CompilerParams(
            dimension_semantics=("parallel",),   # shard rows across TCs on v7x
            vmem_limit_bytes=int(vmem_limit),
        ),
    )(*flat_inputs)

    out = out[:M, :]
    return out.reshape(*lead, n_out)


# --------------------------------------------------------------------------
# Pure-JAX reference
# --------------------------------------------------------------------------
def mlp_reference(params, x):
    x2d = x.reshape(-1, x.shape[-1])
    n = len(params)
    for i, (w, b) in enumerate(params):
        x2d = x2d @ w + b
        if i < n - 1:
            x2d = jnp.maximum(x2d, 0.0)
    return x2d.reshape(*x.shape[:-1], params[-1][0].shape[1])


if __name__ == "__main__":
    # DETR-style bbox-head MLP: input_dim=32, hidden_dim=32, output_dim=16,
    # num_layers=3, x: [batch=2, seq=8, input_dim=32]
    input_dim, hidden_dim, output_dim, num_layers = 32, 32, 16, 3

    key = jax.random.PRNGKey(0)
    key, kx = jax.random.split(key)
    x = jax.random.normal(kx, (2, 8, input_dim), jnp.float32)

    params = init_mlp_params(key, input_dim, hidden_dim, output_dim, num_layers)

    # Pad parameters ONCE (hoisted out of the per-call path) and jit the
    # forward so the residual pad/slice/reshape ops fuse and dispatch once.
    padded_params = jax.block_until_ready(prepare_mlp_params(params))
    fwd = jax.jit(mlp_forward, static_argnames=("tm_max",))

    out = fwd(padded_params, x)
    out = jax.block_until_ready(out)

    ref = mlp_reference(params, x)
    assert out.shape == (2, 8, output_dim), out.shape
    assert jnp.allclose(out, ref, atol=1e-5, rtol=1e-5), "mismatch vs reference"

    print("KERNEL_OK")
</pallas_src>

<mosaic_0001>
module attributes {stable_mosaic.version = 11 : i64} {
  func.func @_mlp_fused_kernel(%arg0: i32, %arg1: memref<8x128xf32, #tpu.memory_space<vmem>>, %arg2: memref<128x128xf32, #tpu.memory_space<vmem>>, %arg3: memref<1x128xf32, #tpu.memory_space<vmem>>, %arg4: memref<128x128xf32, #tpu.memory_space<vmem>>, %arg5: memref<1x128xf32, #tpu.memory_space<vmem>>, %arg6: memref<128x16xf32, #tpu.memory_space<vmem>>, %arg7: memref<1x16xf32, #tpu.memory_space<vmem>>, %arg8: memref<8x16xf32, #tpu.memory_space<vmem>>) attributes {dimension_semantics = [#tpu.dimension_semantics<parallel>], iteration_bounds = array<i64: 2>, scalar_prefetch = 0 : i64, scratch_operands = 0 : i64, tpu.core_type = #tpu.core_type<tc>, window_params = [{transform_indices = @transform_0, window_bounds = array<i64: 8, 128>}, {pipeline_mode = #tpu.pipeline_mode<synchronous>, transform_indices = @transform_1, window_bounds = array<i64: 128, 128>}, {pipeline_mode = #tpu.pipeline_mode<synchronous>, transform_indices = @transform_2, window_bounds = array<i64: 1, 128>}, {pipeline_mode = #tpu.pipeline_mode<synchronous>, transform_indices = @transform_3, window_bounds = array<i64: 128, 128>}, {pipeline_mode = #tpu.pipeline_mode<synchronous>, transform_indices = @transform_4, window_bounds = array<i64: 1, 128>}, {pipeline_mode = #tpu.pipeline_mode<synchronous>, transform_indices = @transform_5, window_bounds = array<i64: 128, 16>}, {pipeline_mode = #tpu.pipeline_mode<synchronous>, transform_indices = @transform_6, window_bounds = array<i64: 1, 16>}, {transform_indices = @transform_7, window_bounds = array<i64: 8, 16>}]} {
    %c0 = arith.constant 0 : index
    %c0_0 = arith.constant 0 : index
    %0 = vector.load %arg1[%c0, %c0_0] : memref<8x128xf32, #tpu.memory_space<vmem>>, vector<8x128xf32>
    %c0_1 = arith.constant 0 : index
    %c0_2 = arith.constant 0 : index
    %1 = vector.load %arg2[%c0_1, %c0_2] : memref<128x128xf32, #tpu.memory_space<vmem>>, vector<128x128xf32>
    %c0_3 = arith.constant 0 : index
    %c0_4 = arith.constant 0 : index
    %2 = vector.load %arg3[%c0_3, %c0_4] : memref<1x128xf32, #tpu.memory_space<vmem>>, vector<1x128xf32>
    %cst = arith.constant dense<0.000000e+00> : vector<8x128xf32>
    %3 = tpu.matmul %0, %1, %cst {dimension_numbers = #tpu.dot_dimension_numbers<[1], [0], [0], [1], [0, 0, 1, 1], [], []>} : vector<8x128xf32>, vector<128x128xf32>, vector<8x128xf32> -> vector<8x128xf32>
    %4 = vector.broadcast %2 : vector<1x128xf32> to vector<8x128xf32>
    %5 = arith.addf %3, %4 : vector<8x128xf32>
    %cst_5 = arith.constant 0.000000e+00 : f32
    %6 = vector.broadcast %cst_5 : f32 to vector<8x128xf32>
    %7 = arith.maximumf %5, %6 : vector<8x128xf32>
    %c0_6 = arith.constant 0 : index
    %c0_7 = arith.constant 0 : index
    %8 = vector.load %arg4[%c0_6, %c0_7] : memref<128x128xf32, #tpu.memory_space<vmem>>, vector<128x128xf32>
    %c0_8 = arith.constant 0 : index
    %c0_9 = arith.constant 0 : index
    %9 = vector.load %arg5[%c0_8, %c0_9] : memref<1x128xf32, #tpu.memory_space<vmem>>, vector<1x128xf32>
    %cst_10 = arith.constant dense<0.000000e+00> : vector<8x128xf32>
    %10 = tpu.matmul %7, %8, %cst_10 {dimension_numbers = #tpu.dot_dimension_numbers<[1], [0], [0], [1], [0, 0, 1, 1], [], []>} : vector<8x128xf32>, vector<128x128xf32>, vector<8x128xf32> -> vector<8x128xf32>
    %11 = vector.broadcast %9 : vector<1x128xf32> to vector<8x128xf32>
    %12 = arith.addf %10, %11 : vector<8x128xf32>
    %cst_11 = arith.constant 0.000000e+00 : f32
    %13 = vector.broadcast %cst_11 : f32 to vector<8x128xf32>
    %14 = arith.maximumf %12, %13 : vector<8x128xf32>
    %c0_12 = arith.constant 0 : index
    %c0_13 = arith.constant 0 : index
    %15 = vector.load %arg6[%c0_12, %c0_13] : memref<128x16xf32, #tpu.memory_space<vmem>>, vector<128x16xf32>
    %c0_14 = arith.constant 0 : index
    %c0_15 = arith.constant 0 : index
    %16 = vector.load %arg7[%c0_14, %c0_15] : memref<1x16xf32, #tpu.memory_space<vmem>>, vector<1x16xf32>
    %cst_16 = arith.constant dense<0.000000e+00> : vector<8x16xf32>
    %17 = tpu.matmul %14, %15, %cst_16 {dimension_numbers = #tpu.dot_dimension_numbers<[1], [0], [0], [1], [0, 0, 1, 1], [], []>} : vector<8x128xf32>, vector<128x16xf32>, vector<8x16xf32> -> vector<8x16xf32>
    %18 = vector.broadcast %16 : vector<1x16xf32> to vector<8x16xf32>
    %19 = arith.addf %17, %18 : vector<8x16xf32>
    %c0_17 = arith.constant 0 : index
    %c0_18 = arith.constant 0 : index
    %20 = vector.load %arg8[%c0_17, %c0_18] : memref<8x16xf32, #tpu.memory_space<vmem>>, vector<8x16xf32>
    tpu.vector_store %arg8[%c0_17, %c0_18], %19 {strides = array<i32>} : memref<8x16xf32, #tpu.memory_space<vmem>>, vector<8x16xf32>,
    return
  }
  func.func @transform_0(%arg0: i32) -> (i32, i32) {
    %c0_i32 = arith.constant 0 : i32
    %c0_i32_0 = arith.constant 0 : i32
    return %arg0, %c0_i32 : i32, i32
  }
  func.func @transform_1(%arg0: i32) -> (i32, i32) {
    %c0_i32 = arith.constant 0 : i32
    %c0_i32_0 = arith.constant 0 : i32
    %c0_i32_1 = arith.constant 0 : i32
    return %c0_i32, %c0_i32_0 : i32, i32
  }
  func.func @transform_2(%arg0: i32) -> (i32, i32) {
    %c0_i32 = arith.constant 0 : i32
    %c0_i32_0 = arith.constant 0 : i32
    %c0_i32_1 = arith.constant 0 : i32
    return %c0_i32, %c0_i32_0 : i32, i32
  }
  func.func @transform_3(%arg0: i32) -> (i32, i32) {
    %c0_i32 = arith.constant 0 : i32
    %c0_i32_0 = arith.constant 0 : i32
    %c0_i32_1 = arith.constant 0 : i32
    return %c0_i32, %c0_i32_0 : i32, i32
  }
  func.func @transform_4(%arg0: i32) -> (i32, i32) {
    %c0_i32 = arith.constant 0 : i32
    %c0_i32_0 = arith.constant 0 : i32
    %c0_i32_1 = arith.constant 0 : i32
    return %c0_i32, %c0_i32_0 : i32, i32
  }
  func.func @transform_5(%arg0: i32) -> (i32, i32) {
    %c0_i32 = arith.constant 0 : i32
    %c0_i32_0 = arith.constant 0 : i32
    %c0_i32_1 = arith.constant 0 : i32
    return %c0_i32, %c0_i32_0 : i32, i32
  }
  func.func @transform_6(%arg0: i32) -> (i32, i32) {
    %c0_i32 = arith.constant 0 : i32
    %c0_i32_0 = arith.constant 0 : i32
    %c0_i32_1 = arith.constant 0 : i32
    return %c0_i32, %c0_i32_0 : i32, i32
  }
  func.func @transform_7(%arg0: i32) -> (i32, i32) {
    %c0_i32 = arith.constant 0 : i32
    %c0_i32_0 = arith.constant 0 : i32
    return %arg0, %c0_i32 : i32, i32
  }
}

</mosaic_0001>

<llo_original>
// kernel: mlp_forward.1
$region0: #{mlp_forward.1}
  #allocation0 [shape = 'u32[]', space=smem, size = 0x4, offset = 0x4, fixed_abs, tag = 'smem constant byte address 0x4 - core index']
  #allocation1 [shape = 'u32[144,128]{1,0:T(1,128)}', space=vmem, size = 0x12000, scoped, tag = 'internal scratch']
  %s0 = inlined_call_operand.vmem [shape: f32[16,128], index: 0, kind: input, shape index: {}]
  %s1 = inlined_call_operand.vmem [shape: f32[128,128], index: 1, kind: input, shape index: {}]
  %s2 = inlined_call_operand.vmem [shape: f32[1,128], index: 2, kind: input, shape index: {}]
  %s3 = inlined_call_operand.hbm [shape: f32[128,128], index: 3, kind: input, shape index: {}]
  %s4 = inlined_call_operand.vmem [shape: f32[1,128], index: 4, kind: input, shape index: {}]
  %s5 = inlined_call_operand.vmem [shape: f32[128,16], index: 5, kind: input, shape index: {}]
  %s6 = inlined_call_operand.vmem [shape: f32[1,16], index: 6, kind: input, shape index: {}]
  %s7 = inlined_call_operand.hbm [shape: f32[16,16], index: 7, kind: output, shape index: {}]
  %s8 = sld [smem:[#allocation0]]
  $region65: #{mlp_forward.1} parent=0
    _
  %s10 = ssub.s32 1, %s8
  %s11 = scalar_select 0, %s10, %s8
  $region1: #{mlp_forward.1} parent=0
    #allocation2 [shape = 'u8[65536]{0}', space=vmem, size = 0x10000, scoped, tag = 'input window, operand 3, single buffered']
    #allocation3 [shape = 's32[2]{0}', space=sflag, size = 0x8, scoped, tag = 'scoped memory for mlp_forward.1']
    #allocation4 [shape = 's32[2]{0}', space=sflag, size = 0x8, scoped, tag = 'scoped memory for mlp_forward.1']
    #allocation5 [shape = 'u8[8192]{0}', space=vmem, size = 0x2000, scoped, tag = 'output window, operand 0']
    %12 = vsyncpa [#allocation3], 0
    %13 = vsyncpa [#allocation4], 0
    %s14 = scalar_lea.sflag [#allocation4], 1
    %15 = vsyncpa %s14, 0
    loop: start=0, step=1, limit=4
    $region2: #{mlp_forward.1} parent=1 // loop_pre_header
      _
    $region3: #{mlp_forward.1} parent=1 // loop_header
      %s17 = sphi 0, %s21
      %p18 = scmp.ge.s32.totalorder %s17, 4
      %s27 = sphi 0, %s29
      %s30 = sphi 0, %s27
      %s31 = sphi 0, %s30
      %s47 = sphi 0, %s31
      %s51 = sphi 0, %s51
      %s53 = sphi 0, %s51
      %s54 = sphi 0, %s53
      %s68 = sphi 0, %s54
      %s72 = sphi 0, %s72
      %s74 = sphi 0, %s72
      %s75 = sphi 0, %s74
      %s89 = sphi 0, %s75
      %s93 = sphi 0, %s93
      %s95 = sphi 0, %s93
      %s96 = sphi 0, %s95
      %s110 = sphi 0, %s96
      %s114 = sphi 0, %s114
      %s116 = sphi 0, %s114
      %s117 = sphi 0, %s116
      %s131 = sphi 0, %s117
      %s135 = sphi 0, %s135
      %s137 = sphi 0, %s135
      %s138 = sphi 0, %s137
      %s152 = sphi 0, %s138
      %s156 = sphi 0, %s156
      %s158 = sphi 0, %s156
      %s159 = sphi 0, %s158
      %s173 = sphi 0, %s159
      %s179 = sphi 0, %s181
      %s182 = sphi 0, %s179
      %s183 = sphi 0, %s182
      %s199 = sphi 0, %s183
    $region4: #{mlp_forward.1} parent=1 // loop_header_branch
      %20 = sbr.rel (%p18) target = $region8
    $region5: #{mlp_forward.1} parent=1 // loop_body
      %s22 = ssub.s32 %s17, 1
      %s23 = ssub.s32 %s17, 2
      %s24 = sadd.s32 %s17, 1
      %s25 = ssub.s32 %s17, %s24
      %p26 = scmp.eq.s32.totalorder %s25, 0
      %s28 = sadd.s32 %s27, 1
      %s29 = scalar_select %p26, %s27, %s28
      %p32 = pneg %p26
      %p33 = scmp.eq.s32.totalorder %s17, 1
      %p34 = por %p32, %p33
      %p35 = scmp.ne.s32.totalorder %s27, %s30
      %p36 = scmp.eq.s32.totalorder %s17, 0
      %p37 = por %p35, %p36
      %p38 = scmp.ne.s32.totalorder %s27, %s30
      %p39 = scmp.eq.s32.totalorder %s22, 1
      %p40 = por %p38, %p39
      %p41 = scmp.ne.s32.totalorder %s30, %s31
      %p42 = scmp.eq.s32.totalorder %s22, 0
      %p43 = por %p41, %p42
      %p44 = scmp.ne.s32.totalorder %s30, %s31
      %p45 = scmp.eq.s32.totalorder %s23, 1
      %p46 = por %p44, %p45
      %p48 = scmp.ne.s32.totalorder %s31, %s47
      %p49 = scmp.eq.s32.totalorder %s23, 0
      %p50 = por %p48, %p49
      %s52 = sadd.s32 %s51, 1
      %p55 = scmp.eq.s32.totalorder %s17, 1
      %p56 = scmp.ne.s32.totalorder %s51, %s53
      %p57 = scmp.eq.s32.totalorder %s17, 0
      %p58 = por %p56, %p57
      %p59 = scmp.ne.s32.totalorder %s51, %s53
      %p60 = scmp.eq.s32.totalorder %s22, 1
      %p61 = por %p59, %p60
      %p62 = scmp.ne.s32.totalorder %s53, %s54
      %p63 = scmp.eq.s32.totalorder %s22, 0
      %p64 = por %p62, %p63
      %p65 = scmp.ne.s32.totalorder %s53, %s54
      %p66 = scmp.eq.s32.totalorder %s23, 1
      %p67 = por %p65, %p66
      %p69 = scmp.ne.s32.totalorder %s54, %s68
      %p70 = scmp.eq.s32.totalorder %s23, 0
      %p71 = por %p69, %p70
      %s73 = sadd.s32 %s72, 1
      %p76 = scmp.eq.s32.totalorder %s17, 1
      %p77 = scmp.ne.s32.totalorder %s72, %s74
      %p78 = scmp.eq.s32.totalorder %s17, 0
      %p79 = por %p77, %p78
      %p80 = scmp.ne.s32.totalorder %s72, %s74
      %p81 = scmp.eq.s32.totalorder %s22, 1
      %p82 = por %p80, %p81
      %p83 = scmp.ne.s32.totalorder %s74, %s75
      %p84 = scmp.eq.s32.totalorder %s22, 0
      %p85 = por %p83, %p84
      %p86 = scmp.ne.s32.totalorder %s74, %s75
      %p87 = scmp.eq.s32.totalorder %s23, 1
      %p88 = por %p86, %p87
      %p90 = scmp.ne.s32.totalorder %s75, %s89
      %p91 = scmp.eq.s32.totalorder %s23, 0
      %p92 = por %p90, %p91
      %s94 = sadd.s32 %s93, 1
      %p97 = scmp.eq.s32.totalorder %s17, 1
      %p98 = scmp.ne.s32.totalorder %s93, %s95
      %p99 = scmp.eq.s32.totalorder %s17, 0
      %p100 = por %p98, %p99
      %p101 = scmp.ne.s32.totalorder %s93, %s95
      %p102 = scmp.eq.s32.totalorder %s22, 1
      %p103 = por %p101, %p102
      %p104 = scmp.ne.s32.totalorder %s95, %s96
      %p105 = scmp.eq.s32.totalorder %s22, 0
      %p106 = por %p104, %p105
      %p107 = scmp.ne.s32.totalorder %s95, %s96
      %p108 = scmp.eq.s32.totalorder %s23, 1
      %p109 = por %p107, %p108
      %p111 = scmp.ne.s32.totalorder %s96, %s110
      %p112 = scmp.eq.s32.totalorder %s23, 0
      %p113 = por %p111, %p112
      %s115 = sadd.s32 %s114, 1
      %p118 = scmp.eq.s32.totalorder %s17, 1
      %p119 = scmp.ne.s32.totalorder %s114, %s116
      %p120 = scmp.eq.s32.totalorder %s17, 0
      %p121 = por %p119, %p120
      %p122 = scmp.ne.s32.totalorder %s114, %s116
      %p123 = scmp.eq.s32.totalorder %s22, 1
      %p124 = por %p122, %p123
      %p125 = scmp.ne.s32.totalorder %s116, %s117
      %p126 = scmp.eq.s32.totalorder %s22, 0
      %p127 = por %p125, %p126
      %p128 = scmp.ne.s32.totalorder %s116, %s117
      %p129 = scmp.eq.s32.totalorder %s23, 1
      %p130 = por %p128, %p129
      %p132 = scmp.ne.s32.totalorder %s117, %s131
      %p133 = scmp.eq.s32.totalorder %s23, 0
      %p134 = por %p132, %p133
      %s136 = sadd.s32 %s135, 1
      %p139 = scmp.eq.s32.totalorder %s17, 1
      %p140 = scmp.ne.s32.totalorder %s135, %s137
      %p141 = scmp.eq.s32.totalorder %s17, 0
      %p142 = por %p140, %p141
      %p143 = scmp.ne.s32.totalorder %s135, %s137
      %p144 = scmp.eq.s32.totalorder %s22, 1
      %p145 = por %p143, %p144
      %p146 = scmp.ne.s32.totalorder %s137, %s138
      %p147 = scmp.eq.s32.totalorder %s22, 0
      %p148 = por %p146, %p147
      %p149 = scmp.ne.s32.totalorder %s137, %s138
      %p150 = scmp.eq.s32.totalorder %s23, 1
      %p151 = por %p149, %p150
      %p153 = scmp.ne.s32.totalorder %s138, %s152
      %p154 = scmp.eq.s32.totalorder %s23, 0
      %p155 = por %p153, %p154
      %s157 = sadd.s32 %s156, 1
      %p160 = scmp.eq.s32.totalorder %s17, 1
      %p161 = scmp.ne.s32.totalorder %s156, %s158
      %p162 = scmp.eq.s32.totalorder %s17, 0
      %p163 = por %p161, %p162
      %p164 = scmp.ne.s32.totalorder %s156, %s158
      %p165 = scmp.eq.s32.totalorder %s22, 1
      %p166 = por %p164, %p165
      %p167 = scmp.ne.s32.totalorder %s158, %s159
      %p168 = scmp.eq.s32.totalorder %s22, 0
      %p169 = por %p167, %p168
      %p170 = scmp.ne.s32.totalorder %s158, %s159
      %p171 = scmp.eq.s32.totalorder %s23, 1
      %p172 = por %p170, %p171
      %p174 = scmp.ne.s32.totalorder %s159, %s173
      %p175 = scmp.eq.s32.totalorder %s23, 0
      %p176 = por %p174, %p175
      %s177 = ssub.s32 %s17, %s24
      %p178 = scmp.eq.s32.totalorder %s177, 0
      %s180 = sadd.s32 %s179, 1
      %s181 = scalar_select %p178, %s179, %s180
      %p184 = pneg %p178
      %p185 = scmp.eq.s32.totalorder %s17, 1
      %p186 = por %p184, %p185
      %p187 = scmp.ne.s32.totalorder %s179, %s182
      %p188 = scmp.eq.s32.totalorder %s17, 0
      %p189 = por %p187, %p188
      %p190 = scmp.ne.s32.totalorder %s179, %s182
      %p191 = scmp.eq.s32.totalorder %s22, 1
      %p192 = por %p190, %p191
      %p193 = scmp.ne.s32.totalorder %s182, %s183
      %p194 = scmp.eq.s32.totalorder %s22, 0
      %p195 = por %p193, %p194
      %p196 = scmp.ne.s32.totalorder %s182, %s183
      %p197 = scmp.eq.s32.totalorder %s23, 1
      %p198 = por %p196, %p197
      %p200 = scmp.ne.s32.totalorder %s183, %s199
      %p201 = scmp.eq.s32.totalorder %s23, 0
      %p202 = por %p200, %p201
      %p203 = scmp.le.s32.totalorder 1, %s17
      %p204 = scmp.lt.s32.totalorder %s17, 3
      %p205 = pnand %p203, %p204
      %p206 = pneg %p205
      // Predicated region
      $region9: #{mlp_forward.1} parent=5 // pred_check
        _
      $region10: #{mlp_forward.1} parent=5 // pred_check_branch
        %208 = sbr.rel (%p205) target = $region12
      $region11: #{mlp_forward.1} parent=5 // pred_region
        %s209 = ssub.s32 %s17, 1
        // Predicated region
        $region13: #{mlp_forward.1} parent=11 // pred_check
          %p210 = pneg %p64
        $region14: #{mlp_forward.1} parent=11 // pred_check_branch
          %212 = sbr.rel (%p210) target = $region16
        $region15: #{mlp_forward.1} parent=11 // pred_region
          _
        $region16: #{mlp_forward.1} parent=11 // pred_fallthru
          _
        // Predicated region
        $region17: #{mlp_forward.1} parent=11 // pred_check
          %p213 = pneg %p85
        $region18: #{mlp_forward.1} parent=11 // pred_check_branch
          %215 = sbr.rel (%p213) target = $region20
        $region19: #{mlp_forward.1} parent=11 // pred_region
          _
        $region20: #{mlp_forward.1} parent=11 // pred_fallthru
          _
        // Predicated region
        $region21: #{mlp_forward.1} parent=11 // pred_check
          %p216 = pneg %p106
        $region22: #{mlp_forward.1} parent=11 // pred_check_branch
          %218 = sbr.rel (%p216) target = $region24
        $region23: #{mlp_forward.1} parent=11 // pred_region
          %s220 = ssub.s32 2048, 2048
          %221 = vsyncadd [#allocation3], %s220
          %s222 = sshll.u32 [#allocation2], 4
          %s223 = int_to_ptr.vmem [resolvable:$true] %s222
          %228 = dma.hbm_to_vmem [thread:$0]  %s3, 2048, %s223, [#allocation3], 128, 128, 8
        $region24: #{mlp_forward.1} parent=11 // pred_fallthru
          _
        // Predicated region
        $region25: #{mlp_forward.1} parent=11 // pred_check
          %p229 = pneg %p127
        $region26: #{mlp_forward.1} parent=11 // pred_check_branch
          %231 = sbr.rel (%p229) target = $region28
        $region27: #{mlp_forward.1} parent=11 // pred_region
          _
        $region28: #{mlp_forward.1} parent=11 // pred_fallthru
          _
        // Predicated region
        $region29: #{mlp_forward.1} parent=11 // pred_check
          %p232 = pneg %p148
        $region30: #{mlp_forward.1} parent=11 // pred_check_branch
          %234 = sbr.rel (%p232) target = $region32
        $region31: #{mlp_forward.1} parent=11 // pred_region
          _
        $region32: #{mlp_forward.1} parent=11 // pred_fallthru
          _
        // Predicated region
        $region33: #{mlp_forward.1} parent=11 // pred_check
          %p235 = pneg %p169
        $region34: #{mlp_forward.1} parent=11 // pred_check_branch
          %237 = sbr.rel (%p235) target = $region36
        $region35: #{mlp_forward.1} parent=11 // pred_region
          _
        $region36: #{mlp_forward.1} parent=11 // pred_fallthru
          _
      $region12: #{mlp_forward.1} parent=5 // pred_fallthru
        _
      %p238 = scmp.lt.s32.totalorder %s17, 2
      // Predicated region
      $region37: #{mlp_forward.1} parent=5 // pred_check
        %p239 = pneg %p238
      $region38: #{mlp_forward.1} parent=5 // pred_check_branch
        %241 = sbr.rel (%p239) target = $region40
      $region39: #{mlp_forward.1} parent=5 // pred_region
        // Predicated region
        $region41: #{mlp_forward.1} parent=39 // pred_check
          %p242 = pneg %p37
        $region42: #{mlp_forward.1} parent=39 // pred_check_branch
          %244 = sbr.rel (%p242) target = $region44
        $region43: #{mlp_forward.1} parent=39 // pred_region
          %p245 = scmp.lt.s32.totalorder %s17, 1
          %s246 = scalar_select %p245, %s17, 1
          %s247 = smul.addr %s246, 8
          %s248 = scalar_lea.vmem %s0, %s247
        $region44: #{mlp_forward.1} parent=39 // pred_fallthru
          _
      $region40: #{mlp_forward.1} parent=5 // pred_fallthru
        _
      %p249 = scmp.le.s32.totalorder 1, %s17
      %p250 = scmp.lt.s32.totalorder %s17, 3
      %p251 = pnand %p249, %p250
      %p252 = pneg %p251
      // Predicated region
      $region45: #{mlp_forward.1} parent=5 // pred_check
        _
      $region46: #{mlp_forward.1} parent=5 // pred_check_branch
        %254 = sbr.rel (%p251) target = $region48
      $region47: #{mlp_forward.1} parent=5 // pred_region
        %s255 = ssub.s32 %s17, 1
        // Predicated region
        $region49: #{mlp_forward.1} parent=47 // pred_check
          %p256 = pneg %p106
        $region50: #{mlp_forward.1} parent=47 // pred_check_branch
          %258 = sbr.rel (%p256) target = $region52
        $region51: #{mlp_forward.1} parent=47 // pred_region
          %259 = dma.done [#allocation3], 2048
        $region52: #{mlp_forward.1} parent=47 // pred_fallthru
          _
        %p260 = scmp.lt.s32.totalorder %s22, 1
        %s261 = scalar_select %p260, %s22, 1
        %s262 = smul.addr %s261, 8
        %s263 = scalar_lea.vmem %s0, %s262
        %p264 = pneg %p43
        %p265 = pneg %p40
        %p266 = pneg %p64
        %p267 = pneg %p61
        %p268 = pneg %p85
        %p269 = pneg %p82
        %p270 = pneg %p106
        %p271 = pneg %p103
        %p272 = pneg %p127
        %p273 = pneg %p124
        %p274 = pneg %p148
        %p275 = pneg %p145
        %p276 = pneg %p169
        %p277 = pneg %p166
        %p278 = pneg %p195
        %p279 = pneg %p192
        %s280 = sand.u32 %s182, 1
        %s281 = scalar_lea.sflag [#allocation4], %s280
        %s282 = sand.u32 %s182, 1
        %s283 = smul.addr %s282, 8
        %s284 = scalar_lea.vmem [#allocation5], %s283
        %p285 = scmp.lt.s32.totalorder %s22, 1
        %s286 = scalar_select %p285, %s22, 1
        %s287 = smul.addr %s286, 8
        %s288 = scalar_lea.vmem %s0, %s287
        %v289 = vld [vmem:[%s288] sm:$0xff]
        %v290 = vld [vmem:[%s1] sm:$0xff]
        %v291 = vld [vmem:[%s1 + $0x8] sm:$0xff]
        %v292 = vld [vmem:[%s1 + $0x10] sm:$0xff]
        %v293 = vld [vmem:[%s1 + $0x18] sm:$0xff]
        %v294 = vld [vmem:[%s1 + $0x20] sm:$0xff]
        %v295 = vld [vmem:[%s1 + $0x28] sm:$0xff]
        %v296 = vld [vmem:[%s1 + $0x30] sm:$0xff]
        %v297 = vld [vmem:[%s1 + $0x38] sm:$0xff]
        %v298 = vld [vmem:[%s1 + $0x40] sm:$0xff]
        %v299 = vld [vmem:[%s1 + $0x48] sm:$0xff]
        %v300 = vld [vmem:[%s1 + $0x50] sm:$0xff]
        %v301 = vld [vmem:[%s1 + $0x58] sm:$0xff]
        %v302 = vld [vmem:[%s1 + $0x60] sm:$0xff]
        %v303 = vld [vmem:[%s1 + $0x68] sm:$0xff]
        %v304 = vld [vmem:[%s1 + $0x70] sm:$0xff]
        %v305 = vld [vmem:[%s1 + $0x78] sm:$0xff]
        %v306 = vld [vmem:[%s2] sm:$0x1]
        %v308 = vlaneseq
        %v309 = vshrl.u32 %v308, 7
        %v310 = vsub.s32 0, %v309
        %v311 = vrot.slane %v306, %v310
        %313 = vmatprep.subr.mxu0 0.0
        %314 = vmatpush1.msra.mxu0 %v290
        %315 = vmatprep.subr.mxu0 0.0
        %316 = vmatpush1.msra.mxu0 %v291
        %317 = vmatprep.subr.mxu0 0.0
        %318 = vmatpush1.msra.mxu0 %v292
        %319 = vmatprep.subr.mxu0 0.0
        %320 = vmatpush1.msra.mxu0 %v293
        %321 = vmatprep.subr.mxu0 0.0
        %322 = vmatpush1.msra.mxu0 %v294
        %323 = vmatprep.subr.mxu0 0.0
        %324 = vmatpush1.msra.mxu0 %v295
        %325 = vmatprep.subr.mxu0 0.0
        %326 = vmatpush1.msra.mxu0 %v296
        %327 = vmatprep.subr.mxu0 0.0
        %328 = vmatpush1.msra.mxu0 %v297
        %329 = vmatprep.subr.mxu0 0.0
        %330 = vmatpush1.msra.mxu0 %v298
        %331 = vmatprep.subr.mxu0 0.0
        %332 = vmatpush1.msra.mxu0 %v299
        %333 = vmatprep.subr.mxu0 0.0
        %334 = vmatpush1.msra.mxu0 %v300
        %335 = vmatprep.subr.mxu0 0.0
        %336 = vmatpush1.msra.mxu0 %v301
        %337 = vmatprep.subr.mxu0 0.0
        %338 = vmatpush1.msra.mxu0 %v302
        %339 = vmatprep.subr.mxu0 0.0
        %340 = vmatpush1.msra.mxu0 %v303
        %341 = vmatprep.subr.mxu0 0.0
        %342 = vmatpush1.msra.mxu0 %v304
        %343 = vmatprep.subr.mxu0 0.0
        %344 = vmatpush1.msra.mxu0 %v305
        %345 = vmatprep.subr.mxu0 0.0
        %346 = vmatpush1.msra.mxu0 0.0
        %347 = vmatprep.subr.mxu0 0.0
        %348 = vmatpush1.msra.mxu0 0.0
        %349 = vmatprep.subr.mxu0 0.0
        %350 = vmatpush1.msra.mxu0 0.0
        %351 = vmatprep.subr.mxu0 0.0
        %352 = vmatpush1.msra.mxu0 0.0
        %353 = vmatprep.subr.mxu0 0.0
        %354 = vmatpush1.msra.mxu0 0.0
        %355 = vmatprep.subr.mxu0 0.0
        %356 = vmatpush1.msra.mxu0 0.0
        %357 = vmatprep.subr.mxu0 0.0
        %358 = vmatpush1.msra.mxu0 0.0
        %359 = vmatprep.subr.mxu0 0.0
        %360 = vmatpush1.msra.mxu0 0.0
        %361 = vmatprep.subr.mxu0 0.0
        %362 = vmatpush1.msra.mxu0 0.0
        %363 = vmatprep.subr.mxu0 0.0
        %364 = vmatpush1.msra.mxu0 0.0
        %365 = vmatprep.subr.mxu0 0.0
        %366 = vmatpush1.msra.mxu0 0.0
        %367 = vmatprep.subr.mxu0 0.0
        %368 = vmatpush1.msra.mxu0 0.0
        %369 = vmatprep.subr.mxu0 0.0
        %370 = vmatpush1.msra.mxu0 0.0
        %371 = vmatprep.subr.mxu0 0.0
        %372 = vmatpush1.msra.mxu0 0.0
        %373 = vmatprep.subr.mxu0 0.0
        %374 = vmatpush1.msra.mxu0 0.0
        %375 = vmatprep.subr.mxu0 0.0
        %376 = vmatpush1.msra.mxu0 0.0
        %377 = vmatprep.mubr.f32.mxu0 0.0
        %378 = vmatmul.mubr.f32.gmra.mrb[0].mxu0 %v289
        %v379 = vpop.f32.mrb[0].mxu0
        %v380 = vadd.f32 %v311, %v379
        %v381 = vpop.f32.mrb[0].mxu0
        %382 = vdwg.mxu0
        %v383 = vmax.f32 %v380, 0.0
        %v384 = vld [vmem:[#allocation2] sm:$0xff]
        %v385 = vld [vmem:[#allocation2 + $0x8] sm:$0xff]
        %v386 = vld [vmem:[#allocation2 + $0x10] sm:$0xff]
        %v387 = vld [vmem:[#allocation2 + $0x18] sm:$0xff]
        %v388 = vld [vmem:[#allocation2 + $0x20] sm:$0xff]
        %v389 = vld [vmem:[#allocation2 + $0x28] sm:$0xff]
        %v390 = vld [vmem:[#allocation2 + $0x30] sm:$0xff]
        %v391 = vld [vmem:[#allocation2 + $0x38] sm:$0xff]
        %v392 = vld [vmem:[#allocation2 + $0x40] sm:$0xff]
        %v393 = vld [vmem:[#allocation2 + $0x48] sm:$0xff]
        %v394 = vld [vmem:[#allocation2 + $0x50] sm:$0xff]
        %v395 = vld [vmem:[#allocation2 + $0x58] sm:$0xff]
        %v396 = vld [vmem:[#allocation2 + $0x60] sm:$0xff]
        %v397 = vld [vmem:[#allocation2 + $0x68] sm:$0xff]
        %v398 = vld [vmem:[#allocation2 + $0x70] sm:$0xff]
        %v399 = vld [vmem:[#allocation2 + $0x78] sm:$0xff]
        %v400 = vld [vmem:[%s4] sm:$0x1]
        %v402 = vlaneseq
        %v403 = vshrl.u32 %v402, 7
        %v404 = vsub.s32 0, %v403
        %v405 = vrot.slane %v400, %v404
        %407 = vmatprep.subr.mxu0 0.0
        %408 = vmatpush1.msra.mxu0 %v384
        %409 = vmatprep.subr.mxu0 0.0
        %410 = vmatpush1.msra.mxu0 %v385
        %411 = vmatprep.subr.mxu0 0.0
        %412 = vmatpush1.msra.mxu0 %v386
        %413 = vmatprep.subr.mxu0 0.0
        %414 = vmatpush1.msra.mxu0 %v387
        %415 = vmatprep.subr.mxu0 0.0
        %416 = vmatpush1.msra.mxu0 %v388
        %417 = vmatprep.subr.mxu0 0.0
        %418 = vmatpush1.msra.mxu0 %v389
        %419 = vmatprep.subr.mxu0 0.0
        %420 = vmatpush1.msra.mxu0 %v390
        %421 = vmatprep.subr.mxu0 0.0
        %422 = vmatpush1.msra.mxu0 %v391
        %423 = vmatprep.subr.mxu0 0.0
        %424 = vmatpush1.msra.mxu0 %v392
        %425 = vmatprep.subr.mxu0 0.0
        %426 = vmatpush1.msra.mxu0 %v393
        %427 = vmatprep.subr.mxu0 0.0
        %428 = vmatpush1.msra.mxu0 %v394
        %429 = vmatprep.subr.mxu0 0.0
        %430 = vmatpush1.msra.mxu0 %v395
        %431 = vmatprep.subr.mxu0 0.0
        %432 = vmatpush1.msra.mxu0 %v396
        %433 = vmatprep.subr.mxu0 0.0
        %434 = vmatpush1.msra.mxu0 %v397
        %435 = vmatprep.subr.mxu0 0.0
        %436 = vmatpush1.msra.mxu0 %v398
        %437 = vmatprep.subr.mxu0 0.0
        %438 = vmatpush1.msra.mxu0 %v399
        %439 = vmatprep.subr.mxu0 0.0
        %440 = vmatpush1.msra.mxu0 0.0
        %441 = vmatprep.subr.mxu0 0.0
        %442 = vmatpush1.msra.mxu0 0.0
        %443 = vmatprep.subr.mxu0 0.0
        %444 = vmatpush1.msra.mxu0 0.0
        %445 = vmatprep.subr.mxu0 0.0
        %446 = vmatpush1.msra.mxu0 0.0
        %447 = vmatprep.subr.mxu0 0.0
        %448 = vmatpush1.msra.mxu0 0.0
        %449 = vmatprep.subr.mxu0 0.0
        %450 = vmatpush1.msra.mxu0 0.0
        %451 = vmatprep.subr.mxu0 0.0
        %452 = vmatpush1.msra.mxu0 0.0
        %453 = vmatprep.subr.mxu0 0.0
        %454 = vmatpush1.msra.mxu0 0.0
        %455 = vmatprep.subr.mxu0 0.0
        %456 = vmatpush1.msra.mxu0 0.0
        %457 = vmatprep.subr.mxu0 0.0
        %458 = vmatpush1.msra.mxu0 0.0
        %459 = vmatprep.subr.mxu0 0.0
        %460 = vmatpush1.msra.mxu0 0.0
        %461 = vmatprep.subr.mxu0 0.0
        %462 = vmatpush1.msra.mxu0 0.0
        %463 = vmatprep.subr.mxu0 0.0
        %464 = vmatpush1.msra.mxu0 0.0
        %465 = vmatprep.subr.mxu0 0.0
        %466 = vmatpush1.msra.mxu0 0.0
        %467 = vmatprep.subr.mxu0 0.0
        %468 = vmatpush1.msra.mxu0 0.0
        %469 = vmatprep.subr.mxu0 0.0
        %470 = vmatpush1.msra.mxu0 0.0
        %471 = vmatprep.mubr.f32.mxu0 0.0
        %472 = vmatmul.mubr.f32.gmra.mrb[0].mxu0 %v383
        %v473 = vpop.f32.mrb[0].mxu0
        %v474 = vadd.f32 %v405, %v473
        %v475 = vpop.f32.mrb[0].mxu0
        %476 = vdwg.mxu0
        %v477 = vmax.f32 %v474, 0.0
        %v478 = vld [vmem:[%s5] sm:$0xff]
        %v479 = vld [vmem:[%s5 + $0x8] sm:$0xff]
        %v480 = vld [vmem:[%s5 + $0x10] sm:$0xff]
        %v481 = vld [vmem:[%s5 + $0x18] sm:$0xff]
        %v482 = vld [vmem:[%s5 + $0x20] sm:$0xff]
        %v483 = vld [vmem:[%s5 + $0x28] sm:$0xff]
        %v484 = vld [vmem:[%s5 + $0x30] sm:$0xff]
        %v485 = vld [vmem:[%s5 + $0x38] sm:$0xff]
        %v486 = vld [vmem:[%s5 + $0x40] sm:$0xff]
        %v487 = vld [vmem:[%s5 + $0x48] sm:$0xff]
        %v488 = vld [vmem:[%s5 + $0x50] sm:$0xff]
        %v489 = vld [vmem:[%s5 + $0x58] sm:$0xff]
        %v490 = vld [vmem:[%s5 + $0x60] sm:$0xff]
        %v491 = vld [vmem:[%s5 + $0x68] sm:$0xff]
        %v492 = vld [vmem:[%s5 + $0x70] sm:$0xff]
        %v493 = vld [vmem:[%s5 + $0x78] sm:$0xff]
        %v494 = vld [vmem:[%s6] sm:$0x1]
        %v496 = vlaneseq
        %v497 = vshrl.u32 %v496, 7
        %v498 = vsub.s32 0, %v497
        %v499 = vrot.slane %v494, %v498
        %501 = vmatprep.subr.mxu0 0.0
        %502 = vmatpush1.msra.mxu0 %v478
        %503 = vmatprep.subr.mxu0 0.0
        %504 = vmatpush1.msra.mxu0 %v479
        %505 = vmatprep.subr.mxu0 0.0
        %506 = vmatpush1.msra.mxu0 %v480
        %507 = vmatprep.subr.mxu0 0.0
        %508 = vmatpush1.msra.mxu0 %v481
        %509 = vmatprep.subr.mxu0 0.0
        %510 = vmatpush1.msra.mxu0 %v482
        %511 = vmatprep.subr.mxu0 0.0
        %512 = vmatpush1.msra.mxu0 %v483
        %513 = vmatprep.subr.mxu0 0.0
        %514 = vmatpush1.msra.mxu0 %v484
        %515 = vmatprep.subr.mxu0 0.0
        %516 = vmatpush1.msra.mxu0 %v485
        %517 = vmatprep.subr.mxu0 0.0
        %518 = vmatpush1.msra.mxu0 %v486
        %519 = vmatprep.subr.mxu0 0.0
        %520 = vmatpush1.msra.mxu0 %v487
        %521 = vmatprep.subr.mxu0 0.0
        %522 = vmatpush1.msra.mxu0 %v488
        %523 = vmatprep.subr.mxu0 0.0
        %524 = vmatpush1.msra.mxu0 %v489
        %525 = vmatprep.subr.mxu0 0.0
        %526 = vmatpush1.msra.mxu0 %v490
        %527 = vmatprep.subr.mxu0 0.0
        %528 = vmatpush1.msra.mxu0 %v491
        %529 = vmatprep.subr.mxu0 0.0
        %530 = vmatpush1.msra.mxu0 %v492
        %531 = vmatprep.subr.mxu0 0.0
        %532 = vmatpush1.msra.mxu0 %v493
        %533 = vmatprep.subr.mxu0 0.0
        %534 = vmatpush1.msra.mxu0 0.0
        %535 = vmatprep.subr.mxu0 0.0
        %536 = vmatpush1.msra.mxu0 0.0
        %537 = vmatprep.subr.mxu0 0.0
        %538 = vmatpush1.msra.mxu0 0.0
        %539 = vmatprep.subr.mxu0 0.0
        %540 = vmatpush1.msra.mxu0 0.0
        %541 = vmatprep.subr.mxu0 0.0
        %542 = vmatpush1.msra.mxu0 0.0
        %543 = vmatprep.subr.mxu0 0.0
        %544 = vmatpush1.msra.mxu0 0.0
        %545 = vmatprep.subr.mxu0 0.0
        %546 = vmatpush1.msra.mxu0 0.0
        %547 = vmatprep.subr.mxu0 0.0
        %548 = vmatpush1.msra.mxu0 0.0
        %549 = vmatprep.subr.mxu0 0.0
        %550 = vmatpush1.msra.mxu0 0.0
        %551 = vmatprep.subr.mxu0 0.0
        %552 = vmatpush1.msra.mxu0 0.0
        %553 = vmatprep.subr.mxu0 0.0
        %554 = vmatpush1.msra.mxu0 0.0
        %555 = vmatprep.subr.mxu0 0.0
        %556 = vmatpush1.msra.mxu0 0.0
        %557 = vmatprep.subr.mxu0 0.0
        %558 = vmatpush1.msra.mxu0 0.0
        %559 = vmatprep.subr.mxu0 0.0
        %560 = vmatpush1.msra.mxu0 0.0
        %561 = vmatprep.subr.mxu0 0.0
        %562 = vmatpush1.msra.mxu0 0.0
        %563 = vmatprep.subr.mxu0 0.0
        %564 = vmatpush1.msra.mxu0 0.0
        %565 = vmatprep.mubr.f32.mxu0 0.0
        %566 = vmatmul.mubr.f32.gmra.mrb[0].mxu0 %v477
        %v567 = vpop.f32.mrb[0].mxu0
        %v568 = vadd.f32 %v499, %v567
        %v569 = vpop.f32.mrb[0].mxu0
        %570 = vdwg.mxu0
        %vm571 = vcmask 130048
        %572 = vst.msk [vmem:[%s284] sm:$0xff] %vm571, %v568
        %s573 = sand.u32 %s182, 1
        %s574 = scalar_lea.sflag [#allocation4], %s573
        %s575 = sand.u32 %s182, 1
        %s576 = smul.addr %s575, 8
        %s577 = scalar_lea.vmem [#allocation5], %s576
        // Predicated region
        $region53: #{mlp_forward.1} parent=47 // pred_check
          %p578 = pneg %p192
        $region54: #{mlp_forward.1} parent=47 // pred_check_branch
          %580 = sbr.rel (%p578) target = $region56
        $region55: #{mlp_forward.1} parent=47 // pred_region
          %s582 = ssub.s32 128, 128
          %583 = vsyncadd %s574, %s582
          %s584 = smul.addr %s22, 128
          %s585 = scalar_lea.hbm %s7, %s584
          %s587 = sshll.u32 %s577, 4
          %s588 = int_to_ptr.vmem [resolvable:$true] %s587
          %590 = dma.vmem_to_hbm [thread:$0]  %s588, 128, %s585, %s574
        $region56: #{mlp_forward.1} parent=47 // pred_fallthru
          _
      $region48: #{mlp_forward.1} parent=5 // pred_fallthru
        _
      %p591 = scmp.le.s32.totalorder 2, %s17
      // Predicated region
      $region57: #{mlp_forward.1} parent=5 // pred_check
        %p592 = pneg %p591
      $region58: #{mlp_forward.1} parent=5 // pred_check_branch
        %594 = sbr.rel (%p592) target = $region60
      $region59: #{mlp_forward.1} parent=5 // pred_region
        %s595 = ssub.s32 %s17, 2
        // Predicated region
        $region61: #{mlp_forward.1} parent=59 // pred_check
          %p596 = pneg %p198
        $region62: #{mlp_forward.1} parent=59 // pred_check_branch
          %598 = sbr.rel (%p596) target = $region64
        $region63: #{mlp_forward.1} parent=59 // pred_region
          %s599 = sand.u32 %s183, 1
          %s600 = scalar_lea.sflag [#allocation4], %s599
          %s601 = sand.u32 %s183, 1
          %s602 = smul.addr %s601, 8
          %s603 = scalar_lea.vmem [#allocation5], %s602
          %604 = dma.done %s600, 128
        $region64: #{mlp_forward.1} parent=59 // pred_fallthru
          _
      $region60: #{mlp_forward.1} parent=5 // pred_fallthru
        _
    $region6: #{mlp_forward.1} parent=1 // loop_footer
      %s21 = sadd.s32 1, %s17
    $region7: #{mlp_forward.1} parent=1 // loop_footer_branch
      %16 = sbr.rel target = $region3
    $region8: #{mlp_forward.1} parent=1 // loop_exit
      _
    %605 = vsyncpa [#allocation3], 1
    %s606 = scalar_lea.sflag [#allocation3], 1
    %607 = vsyncpa %s606, 1
    %608 = vsyncpa [#allocation4], 1
    %s609 = scalar_lea.sflag [#allocation4], 1
    %610 = vsyncpa %s609, 1

</llo_original>
